<compile_context>
chip_gen: v6e
topology: v6e:2x2x1
jax: 0.10.0
libtpu: 0.0.40
codegen_flags: <defaults>
</compile_context>

<pallas_src>
import jax
import jax.numpy as jnp
from jax import lax
from jax.experimental import pallas as pl
from jax.experimental.pallas import tpu as pltpu


def _vmem_config():
    """Return (vmem_limit_bytes, block_budget_bytes, small_vmem) per TPU gen."""
    vmem_bytes = 64 * 1024 * 1024  # conservative default (v7x-sized)
    try:
        info = pltpu.get_tpu_info()
        vmem_bytes = int(getattr(info, "vmem_capacity_bytes", vmem_bytes))
    except Exception:
        pass
    if vmem_bytes >= 100 * 1024 * 1024:
        # v5e / v6e: 128 MiB physical VMEM -> large blocks, fewer grid steps.
        return 100 * 1024 * 1024, 64 * 1024 * 1024, False
    # v7x: 64 MiB per TensorCore -> tighter blocks, keep an even >=2-step grid.
    return 48 * 1024 * 1024, 28 * 1024 * 1024, True


def _choose_block_batch(B, per_batch_bytes, budget_bytes, small_vmem):
    """Largest block_batch under the VMEM budget (no divisor requirement)."""
    bb = max(1, min(B, budget_bytes // max(per_batch_bytes, 1)))
    if small_vmem and B > 1:
        # v7x: 2 TensorCores split the "parallel" batch grid -> keep >= 2
        # grid steps, and prefer an even step count for TC balance.
        bb = min(bb, pl.cdiv(B, 2))
        steps = pl.cdiv(B, bb)
        if steps % 2 == 1 and steps < B:
            bb = max(1, pl.cdiv(B, steps + 1))
    return bb


def _gather_kernel(idx_ref, x_ref, o_ref):
    # idx_ref: VMEM (Bb, K+1, 1) int32 -- full-token gather index per output
    #          row (row 0 is 0 = CLS token, rows 1..K are top-k indices + 1).
    # x_ref  : VMEM (Bb, N, D)
    # o_ref  : VMEM (Bb, K+1, D)
    bb, kp1, _ = idx_ref.shape
    n = x_ref.shape[1]

    # bf16 one-hot selection matrix built on the VPU.  An out-of-range index
    # produces an all-zero row instead of an OOB read.
    iota = lax.broadcasted_iota(jnp.int32, (bb, kp1, n), 2)
    one_hot = (iota == idx_ref[...]).astype(jnp.bfloat16)

    x = x_ref[...]
    if o_ref.dtype == jnp.float32:
        # Exact f32 gather in 3 single-pass MXU matmuls (instead of the 6
        # passes of precision=HIGHEST / bf16_6x): x == hi + mid + lo exactly
        # with three bf16 pieces, the one-hot is exact in bf16, and all other
        # products are exactly zero, so the f32-accumulated sum is bitwise x.
        x_hi = x.astype(jnp.bfloat16)
        r1 = x - x_hi.astype(jnp.float32)
        x_mid = r1.astype(jnp.bfloat16)
        x_lo = (r1 - x_mid.astype(jnp.float32)).astype(jnp.bfloat16)
        acc = jnp.einsum("bkn,bnd->bkd", one_hot, x_hi,
                         preferred_element_type=jnp.float32)
        acc = acc + jnp.einsum("bkn,bnd->bkd", one_hot, x_mid,
                               preferred_element_type=jnp.float32)
        acc = acc + jnp.einsum("bkn,bnd->bkd", one_hot, x_lo,
                               preferred_element_type=jnp.float32)
        o_ref[...] = acc
    else:
        # bf16 (or f16) path: single MXU pass, f32 accumulation -> bit-exact.
        o_ref[...] = jnp.einsum(
            "bkn,bnd->bkd", one_hot.astype(x.dtype), x,
            preferred_element_type=jnp.float32,
        ).astype(o_ref.dtype)


def saliency_dropout_gather(x, indices, *, block_batch=None):
    """Pallas gather: x [B, N, D], indices [B, K] -> [B, K+1, D]."""
    B, N, D = x.shape
    K = indices.shape[1]
    itemsize = jnp.dtype(x.dtype).itemsize
    is_f32 = x.dtype == jnp.float32

    # Full-token gather indices: 0 for the CLS row, then indices + 1.
    idx_full = jnp.concatenate(
        [jnp.zeros((B, 1), jnp.int32), indices.astype(jnp.int32) + 1], axis=1
    )[..., None]  # (B, K+1, 1)

    vmem_limit, block_budget, small_vmem = _vmem_config()

    if block_batch is None:
        # Pallas double-buffers the BlockSpec'd operands (x2 on in/out/idx);
        # the one-hot, f32 accumulator and f32-split temporaries are single.
        per_batch = (
            2 * (N * D + (K + 1) * D) * itemsize   # x in + out, double-buffered
            + 2 * (K + 1) * 4                      # gather indices
            + (K + 1) * N * 2                      # bf16 one-hot
            + (K + 1) * D * 4                      # f32 einsum accumulator
            + (N * D * 10 if is_f32 else 0)        # hi/mid/lo bf16 + f32 residual
        )
        block_batch = _choose_block_batch(B, per_batch, block_budget, small_vmem)
    Bb = max(1, min(int(block_batch), B))

    out = pl.pallas_call(
        _gather_kernel,
        out_shape=jax.ShapeDtypeStruct((B, K + 1, D), x.dtype),
        grid_spec=pltpu.PrefetchScalarGridSpec(
            num_scalar_prefetch=0,
            grid=(pl.cdiv(B, Bb),),   # tail block is masked; no divisor needed
            in_specs=[
                pl.BlockSpec((Bb, K + 1, 1), lambda i: (i, 0, 0)),
                pl.BlockSpec((Bb, N, D), lambda i: (i, 0, 0)),
            ],
            out_specs=pl.BlockSpec((Bb, K + 1, D), lambda i: (i, 0, 0)),
        ),
        compiler_params=pltpu.CompilerParams(
            dimension_semantics=("parallel",),  # batch independent -> 2-TC split on v7x
            vmem_limit_bytes=vmem_limit,
        ),
    )(idx_full, x)
    return out


def set_mask(saliency, dropout_rate):
    """JAX equivalent of SaliencyDropout.set_mask: top-k indices per batch."""
    mask_length = saliency.shape[1]
    after_dropout = int(mask_length * (1 - dropout_rate))  # same truncation as PyTorch
    _, idx = lax.top_k(saliency, after_dropout)            # sorted descending
    return idx.astype(jnp.int32)


def saliency_dropout_forward(x, saliency, dropout_rate):
    indices = set_mask(saliency, dropout_rate)
    return saliency_dropout_gather(x, indices)


def _reference(x, indices):
    # Pure-JAX reference of the PyTorch forward.
    cls_tok = x[:, :1, :]
    patches = x[:, 1:, :]
    sel = jnp.take_along_axis(patches, indices[:, :, None], axis=1)
    return jnp.concatenate([cls_tok, sel], axis=1)


if __name__ == "__main__":
    B, N_PATCHES, D = 2, 16, 32        # tokens = 1 cls + 16 patches
    DROPOUT_RATE = 0.5                 # keeps K = 8 patches

    key = jax.random.PRNGKey(0)
    kx, ks = jax.random.split(key)
    x = jax.random.normal(kx, (B, 1 + N_PATCHES, D), dtype=jnp.float32)
    saliency = jax.random.normal(ks, (B, N_PATCHES), dtype=jnp.float32)

    idx = set_mask(saliency, DROPOUT_RATE)
    K = idx.shape[1]

    # f32 path (exact 3-way-split MXU gather).
    out = saliency_dropout_forward(x, saliency, DROPOUT_RATE)
    out = jax.block_until_ready(out)
    ref = _reference(x, idx)
    assert out.shape == (B, K + 1, D), out.shape
    assert jnp.allclose(out, ref, rtol=1e-6, atol=1e-6), "f32 gather mismatch vs reference"

    # bf16 path (single MXU pass): bit-exact vs a bf16 reference gather.
    x_bf16 = x.astype(jnp.bfloat16)
    out_bf = jax.block_until_ready(saliency_dropout_gather(x_bf16, idx))
    ref_bf = _reference(x_bf16, idx)
    assert out_bf.dtype == jnp.bfloat16 and out_bf.shape == (B, K + 1, D)
    assert bool(jnp.all(out_bf == ref_bf)), "bf16 gather mismatch vs reference"

    print("KERNEL_OK")
</pallas_src>

<mosaic_0001>
module attributes {stable_mosaic.version = 11 : i64} {
  func.func @_gather_kernel(%arg0: i32, %arg1: memref<1x9x1xi32, #tpu.memory_space<vmem>>, %arg2: memref<1x17x32xf32, #tpu.memory_space<vmem>>, %arg3: memref<1x9x32xf32, #tpu.memory_space<vmem>>) attributes {dimension_semantics = [#tpu.dimension_semantics<parallel>], iteration_bounds = array<i64: 2>, scalar_prefetch = 0 : i64, scratch_operands = 0 : i64, tpu.core_type = #tpu.core_type<tc>, window_params = [{transform_indices = @transform_0, window_bounds = array<i64: 1, 9, 1>}, {transform_indices = @transform_1, window_bounds = array<i64: 1, 17, 32>}, {transform_indices = @transform_2, window_bounds = array<i64: 1, 9, 32>}]} {
    %0 = tpu.iota {dimensions = array<i32: 2>} : vector<1x9x17xi32>
    %c0 = arith.constant 0 : index
    %c0_0 = arith.constant 0 : index
    %c0_1 = arith.constant 0 : index
    %1 = vector.load %arg1[%c0, %c0_0, %c0_1] : memref<1x9x1xi32, #tpu.memory_space<vmem>>, vector<1x9x1xi32>
    %2 = vector.broadcast %1 : vector<1x9x1xi32> to vector<1x9x17xi32>
    %3 = arith.cmpi eq, %0, %2 : vector<1x9x17xi32>
    %4 = arith.extui %3 : vector<1x9x17xi1> to vector<1x9x17xi32>
    %5 = arith.sitofp %4 : vector<1x9x17xi32> to vector<1x9x17xf32>
    %6 = arith.truncf %5 : vector<1x9x17xf32> to vector<1x9x17xbf16>
    %c0_2 = arith.constant 0 : index
    %c0_3 = arith.constant 0 : index
    %c0_4 = arith.constant 0 : index
    %7 = vector.load %arg2[%c0_2, %c0_3, %c0_4] : memref<1x17x32xf32, #tpu.memory_space<vmem>>, vector<1x17x32xf32>
    %8 = arith.truncf %7 : vector<1x17x32xf32> to vector<1x17x32xbf16>
    %9 = arith.extf %8 : vector<1x17x32xbf16> to vector<1x17x32xf32>
    %10 = arith.subf %7, %9 : vector<1x17x32xf32>
    %11 = arith.truncf %10 : vector<1x17x32xf32> to vector<1x17x32xbf16>
    %12 = arith.extf %11 : vector<1x17x32xbf16> to vector<1x17x32xf32>
    %13 = arith.subf %10, %12 : vector<1x17x32xf32>
    %14 = arith.truncf %13 : vector<1x17x32xf32> to vector<1x17x32xbf16>
    "tpu.trace_start"() <{level = 10 : i32, message = "bkn,bnd->bkd"}> : () -> ()
    %cst = arith.constant dense<0.000000e+00> : vector<1x9x32xf32>
    %15 = tpu.matmul %6, %8, %cst {dimension_numbers = #tpu.dot_dimension_numbers<[2], [1], [1], [2], [0, 0, 0, 1, 1, 2], [0], [0]>} : vector<1x9x17xbf16>, vector<1x17x32xbf16>, vector<1x9x32xf32> -> vector<1x9x32xf32>
    %cst_5 = arith.constant dense<0.000000e+00> : vector<1x9x32xf32>
    %16 = tpu.matmul %6, %11, %cst_5 {dimension_numbers = #tpu.dot_dimension_numbers<[2], [1], [1], [2], [0, 0, 0, 1, 1, 2], [0], [0]>} : vector<1x9x17xbf16>, vector<1x17x32xbf16>, vector<1x9x32xf32> -> vector<1x9x32xf32>
    "tpu.trace_stop"() : () -> ()
    %17 = arith.addf %15, %16 : vector<1x9x32xf32>
    "tpu.trace_start"() <{level = 10 : i32, message = "bkn,bnd->bkd"}> : () -> ()
    %cst_6 = arith.constant dense<0.000000e+00> : vector<1x9x32xf32>
    %18 = tpu.matmul %6, %14, %cst_6 {dimension_numbers = #tpu.dot_dimension_numbers<[2], [1], [1], [2], [0, 0, 0, 1, 1, 2], [0], [0]>} : vector<1x9x17xbf16>, vector<1x17x32xbf16>, vector<1x9x32xf32> -> vector<1x9x32xf32>
    "tpu.trace_stop"() : () -> ()
    %19 = arith.addf %17, %18 : vector<1x9x32xf32>
    %c0_7 = arith.constant 0 : index
    %c0_8 = arith.constant 0 : index
    %c0_9 = arith.constant 0 : index
    %20 = vector.load %arg3[%c0_7, %c0_8, %c0_9] : memref<1x9x32xf32, #tpu.memory_space<vmem>>, vector<1x9x32xf32>
    tpu.vector_store %arg3[%c0_7, %c0_8, %c0_9], %19 {strides = array<i32>} : memref<1x9x32xf32, #tpu.memory_space<vmem>>, vector<1x9x32xf32>,
    return
  }
  func.func @transform_0(%arg0: i32) -> (i32, i32, i32) {
    %c0_i32 = arith.constant 0 : i32
    %c0_i32_0 = arith.constant 0 : i32
    %c0_i32_1 = arith.constant 0 : i32
    return %arg0, %c0_i32, %c0_i32_0 : i32, i32, i32
  }
  func.func @transform_1(%arg0: i32) -> (i32, i32, i32) {
    %c0_i32 = arith.constant 0 : i32
    %c0_i32_0 = arith.constant 0 : i32
    %c0_i32_1 = arith.constant 0 : i32
    return %arg0, %c0_i32, %c0_i32_0 : i32, i32, i32
  }
  func.func @transform_2(%arg0: i32) -> (i32, i32, i32) {
    %c0_i32 = arith.constant 0 : i32
    %c0_i32_0 = arith.constant 0 : i32
    %c0_i32_1 = arith.constant 0 : i32
    return %arg0, %c0_i32, %c0_i32_0 : i32, i32, i32
  }
}

</mosaic_0001>

<llo_original>
// kernel: tpu_custom_call.1
$region0: #{tpu_custom_call.1}
  #allocation0 [shape = 'u32[]', space=smem, size = 0x4, offset = 0x4, fixed_abs, tag = 'smem constant byte address 0x4 - core index']
  #allocation1 [shape = 'u32[144,128]{1,0:T(1,128)}', space=vmem, size = 0x12000, scoped, tag = 'internal scratch']
  %s0 = inlined_call_operand.vmem [shape: s32[2,9,1], index: 0, kind: input, shape index: {}]
  %s1 = inlined_call_operand.vmem [shape: f32[2,17,32], index: 1, kind: input, shape index: {}]
  %s2 = inlined_call_operand.vmem [shape: f32[2,9,32], index: 2, kind: output, shape index: {}]
  %s3 = sld [smem:[#allocation0]]
  $region41: #{tpu_custom_call.1} parent=0
    _
  %s5 = ssub.s32 1, %s3
  %s6 = scalar_select 0, %s5, %s3
  loop: start=0, step=1, limit=4
  $region2: #{tpu_custom_call.1} parent=0 // loop_pre_header
    _
  $region3: #{tpu_custom_call.1} parent=0 // loop_header
    %s8 = sphi 0, %s12
    %p9 = scmp.ge.s32.totalorder %s8, 4
    %s18 = sphi 0, %s20
    %s21 = sphi 0, %s18
    %s22 = sphi 0, %s21
    %s38 = sphi 0, %s22
    %s44 = sphi 0, %s46
    %s47 = sphi 0, %s44
    %s48 = sphi 0, %s47
    %s64 = sphi 0, %s48
    %s70 = sphi 0, %s72
    %s73 = sphi 0, %s70
    %s74 = sphi 0, %s73
    %s90 = sphi 0, %s74
  $region4: #{tpu_custom_call.1} parent=0 // loop_header_branch
    %11 = sbr.rel (%p9) target = $region8
  $region5: #{tpu_custom_call.1} parent=0 // loop_body
    %s13 = ssub.s32 %s8, 1
    %s14 = ssub.s32 %s8, 2
    %s15 = sadd.s32 %s8, 1
    %s16 = ssub.s32 %s8, %s15
    %p17 = scmp.eq.s32.totalorder %s16, 0
    %s19 = sadd.s32 %s18, 1
    %s20 = scalar_select %p17, %s18, %s19
    %p23 = pneg %p17
    %p24 = scmp.eq.s32.totalorder %s8, 1
    %p25 = por %p23, %p24
    %p26 = scmp.ne.s32.totalorder %s18, %s21
    %p27 = scmp.eq.s32.totalorder %s8, 0
    %p28 = por %p26, %p27
    %p29 = scmp.ne.s32.totalorder %s18, %s21
    %p30 = scmp.eq.s32.totalorder %s13, 1
    %p31 = por %p29, %p30
    %p32 = scmp.ne.s32.totalorder %s21, %s22
    %p33 = scmp.eq.s32.totalorder %s13, 0
    %p34 = por %p32, %p33
    %p35 = scmp.ne.s32.totalorder %s21, %s22
    %p36 = scmp.eq.s32.totalorder %s14, 1
    %p37 = por %p35, %p36
    %p39 = scmp.ne.s32.totalorder %s22, %s38
    %p40 = scmp.eq.s32.totalorder %s14, 0
    %p41 = por %p39, %p40
    %s42 = ssub.s32 %s8, %s15
    %p43 = scmp.eq.s32.totalorder %s42, 0
    %s45 = sadd.s32 %s44, 1
    %s46 = scalar_select %p43, %s44, %s45
    %p49 = pneg %p43
    %p50 = scmp.eq.s32.totalorder %s8, 1
    %p51 = por %p49, %p50
    %p52 = scmp.ne.s32.totalorder %s44, %s47
    %p53 = scmp.eq.s32.totalorder %s8, 0
    %p54 = por %p52, %p53
    %p55 = scmp.ne.s32.totalorder %s44, %s47
    %p56 = scmp.eq.s32.totalorder %s13, 1
    %p57 = por %p55, %p56
    %p58 = scmp.ne.s32.totalorder %s47, %s48
    %p59 = scmp.eq.s32.totalorder %s13, 0
    %p60 = por %p58, %p59
    %p61 = scmp.ne.s32.totalorder %s47, %s48
    %p62 = scmp.eq.s32.totalorder %s14, 1
    %p63 = por %p61, %p62
    %p65 = scmp.ne.s32.totalorder %s48, %s64
    %p66 = scmp.eq.s32.totalorder %s14, 0
    %p67 = por %p65, %p66
    %s68 = ssub.s32 %s8, %s15
    %p69 = scmp.eq.s32.totalorder %s68, 0
    %s71 = sadd.s32 %s70, 1
    %s72 = scalar_select %p69, %s70, %s71
    %p75 = pneg %p69
    %p76 = scmp.eq.s32.totalorder %s8, 1
    %p77 = por %p75, %p76
    %p78 = scmp.ne.s32.totalorder %s70, %s73
    %p79 = scmp.eq.s32.totalorder %s8, 0
    %p80 = por %p78, %p79
    %p81 = scmp.ne.s32.totalorder %s70, %s73
    %p82 = scmp.eq.s32.totalorder %s13, 1
    %p83 = por %p81, %p82
    %p84 = scmp.ne.s32.totalorder %s73, %s74
    %p85 = scmp.eq.s32.totalorder %s13, 0
    %p86 = por %p84, %p85
    %p87 = scmp.ne.s32.totalorder %s73, %s74
    %p88 = scmp.eq.s32.totalorder %s14, 1
    %p89 = por %p87, %p88
    %p91 = scmp.ne.s32.totalorder %s74, %s90
    %p92 = scmp.eq.s32.totalorder %s14, 0
    %p93 = por %p91, %p92
    %p94 = scmp.le.s32.totalorder 1, %s8
    %p95 = scmp.lt.s32.totalorder %s8, 3
    %p96 = pnand %p94, %p95
    %p97 = pneg %p96
    // Predicated region
    $region9: #{tpu_custom_call.1} parent=5 // pred_check
      _
    $region10: #{tpu_custom_call.1} parent=5 // pred_check_branch
      %99 = sbr.rel (%p96) target = $region12
    $region11: #{tpu_custom_call.1} parent=5 // pred_region
      %s100 = ssub.s32 %s8, 1
    $region12: #{tpu_custom_call.1} parent=5 // pred_fallthru
      _
    %p101 = scmp.lt.s32.totalorder %s8, 2
    // Predicated region
    $region13: #{tpu_custom_call.1} parent=5 // pred_check
      %p102 = pneg %p101
    $region14: #{tpu_custom_call.1} parent=5 // pred_check_branch
      %104 = sbr.rel (%p102) target = $region16
    $region15: #{tpu_custom_call.1} parent=5 // pred_region
      // Predicated region
      $region17: #{tpu_custom_call.1} parent=15 // pred_check
        %p105 = pneg %p28
      $region18: #{tpu_custom_call.1} parent=15 // pred_check_branch
        %107 = sbr.rel (%p105) target = $region20
      $region19: #{tpu_custom_call.1} parent=15 // pred_region
        %p108 = scmp.lt.s32.totalorder %s8, 1
        %s109 = scalar_select %p108, %s8, 1
        %s110 = smul.addr %s109, 2
        %s111 = smul.addr %s110, 8
        %s112 = scalar_lea.vmem %s0, %s111
      $region20: #{tpu_custom_call.1} parent=15 // pred_fallthru
        _
      // Predicated region
      $region21: #{tpu_custom_call.1} parent=15 // pred_check
        %p113 = pneg %p54
      $region22: #{tpu_custom_call.1} parent=15 // pred_check_branch
        %115 = sbr.rel (%p113) target = $region24
      $region23: #{tpu_custom_call.1} parent=15 // pred_region
        %p116 = scmp.lt.s32.totalorder %s8, 1
        %s117 = scalar_select %p116, %s8, 1
        %s118 = smul.addr %s117, 3
        %s119 = smul.addr %s118, 8
        %s120 = scalar_lea.vmem %s1, %s119
      $region24: #{tpu_custom_call.1} parent=15 // pred_fallthru
        _
    $region16: #{tpu_custom_call.1} parent=5 // pred_fallthru
      _
    %p121 = scmp.le.s32.totalorder 1, %s8
    %p122 = scmp.lt.s32.totalorder %s8, 3
    %p123 = pnand %p121, %p122
    %p124 = pneg %p123
    // Predicated region
    $region25: #{tpu_custom_call.1} parent=5 // pred_check
      _
    $region26: #{tpu_custom_call.1} parent=5 // pred_check_branch
      %126 = sbr.rel (%p123) target = $region28
    $region27: #{tpu_custom_call.1} parent=5 // pred_region
      %s127 = ssub.s32 %s8, 1
      %p128 = scmp.lt.s32.totalorder %s13, 1
      %s129 = scalar_select %p128, %s13, 1
      %s130 = smul.addr %s129, 2
      %s131 = smul.addr %s130, 8
      %s132 = scalar_lea.vmem %s0, %s131
      %p133 = pneg %p34
      %p134 = pneg %p31
      %p135 = scmp.lt.s32.totalorder %s13, 1
      %s136 = scalar_select %p135, %s13, 1
      %s137 = smul.addr %s136, 3
      %s138 = smul.addr %s137, 8
      %s139 = scalar_lea.vmem %s1, %s138
      %p140 = pneg %p60
      %p141 = pneg %p57
      %p142 = pneg %p86
      %p143 = pneg %p83
      %p144 = scmp.lt.s32.totalorder %s13, 1
      %s145 = scalar_select %p144, %s13, 1
      %s146 = smul.addr %s145, 2
      %s147 = smul.addr %s146, 8
      %s148 = scalar_lea.vmem %s2, %s147
      %p149 = scmp.lt.s32.totalorder %s13, 1
      %s150 = scalar_select %p149, %s13, 1
      %s151 = smul.addr %s150, 2
      %s152 = smul.addr %s151, 8
      %s153 = scalar_lea.vmem %s0, %s152
      %p154 = scmp.lt.s32.totalorder %s13, 1
      %s155 = scalar_select %p154, %s13, 1
      %s156 = smul.addr %s155, 3
      %s157 = smul.addr %s156, 8
      %s158 = scalar_lea.vmem %s1, %s157
      %p159 = scmp.lt.s32.totalorder %s13, 1
      %s160 = scalar_select %p159, %s13, 1
      %s161 = smul.addr %s160, 2
      %s162 = smul.addr %s161, 8
      %s163 = scalar_lea.vmem %s2, %s162
      %v165 = vlaneseq
      %v166 = vand.u32 %v165, 127
      %v167 = vld [vmem:[%s153] sm:$0xff]
      %v168 = vld [vmem:[%s153 + $0x8] sm:$0x1]
      %169 = vset.pattern.permute.xlu0 0
      %170 = vperm.xlu0 %169, %v167
      %v171 = vpop.permute.xlu0 %170
      %172 = vset.pattern.permute.xlu0 0
      %173 = vperm.xlu0 %172, %v168
      %v174 = vpop.permute.xlu0 %173
      %vm175 = vcmp.eq.s32.totalorder %v166, %v171
      %vm176 = vcmp.eq.s32.totalorder %v166, %v174
      %v177 = vsel %vm175, 1, 0
      %v178 = vsel %vm176, 1, 0
      %v179 = vcvt.s32.f32 %v177
      %v180 = vcvt.s32.f32 %v178
      %v181 = vpack.c.bf16 %v180, %v179
      %v182 = vld [vmem:[%s158] sm:$0xff]
      %v183 = vld [vmem:[%s158 + $0x8] sm:$0xff]
      %v184 = vld [vmem:[%s158 + $0x10] sm:$0x1]
      %v185 = vpack.c.bf16 %v183, %v182
      %v186 = vpack.c.bf16 %v184, %v184
      %v187 = vunpack.c.l.bf16 %v185
      %v188 = vunpack.c.h.bf16 %v185
      %v189 = vunpack.c.l.bf16 %v186
      %v190 = vsub.f32 %v182, %v187
      %v191 = vsub.f32 %v183, %v188
      %v192 = vsub.f32 %v184, %v189
      %v193 = vpack.c.bf16 %v191, %v190
      %v194 = vpack.c.bf16 %v192, %v192
      %v195 = vunpack.c.l.bf16 %v193
      %v196 = vunpack.c.h.bf16 %v193
      %v197 = vunpack.c.l.bf16 %v194
      %v198 = vsub.f32 %v190, %v195
      %v199 = vsub.f32 %v191, %v196
      %v200 = vsub.f32 %v192, %v197
      %v201 = vpack.c.bf16 %v199, %v198
      %v202 = vpack.c.bf16 %v200, %v200
      %vm203 = vcmask 138240
      %v205 = vsel %vm203, %v181, 0
      %vm207 = vcmask 1040384
      %v208 = vsel 0, 4294967295, 65535
      %v209 = vsel %vm207, %v208, 0
      %v211 = vand.u32 %v194, %v209
      %213 = vmatprep.subr.bf16.mxu0 0
      %214 = vmatpush1.bf16.msra.mxu0 0
      %215 = vmatprep.subr.bf16.mxu0 0
      %216 = vmatpush1.bf16.msra.mxu0 0
      %217 = vmatprep.subr.bf16.mxu0 0
      %218 = vmatpush1.bf16.msra.mxu0 0
      %219 = vmatprep.subr.bf16.mxu0 0
      %220 = vmatpush1.bf16.msra.mxu0 0
      %221 = vmatprep.subr.bf16.mxu0 0
      %222 = vmatpush1.bf16.msra.mxu0 0
      %223 = vmatprep.subr.bf16.mxu0 0
      %224 = vmatpush1.bf16.msra.mxu0 0
      %225 = vmatprep.subr.bf16.mxu0 0
      %226 = vmatpush1.bf16.msra.mxu0 %v211
      %227 = vmatprep.subr.bf16.mxu0 0
      %228 = vmatpush1.bf16.msra.mxu0 %v193
      %229 = vmatprep.subr.bf16.mxu0 0
      %230 = vmatpush2.bf16.msra.mxu0 0
      %231 = vmatprep.subr.bf16.mxu0 0
      %232 = vmatpush2.bf16.msra.mxu0 0
      %233 = vmatprep.subr.bf16.mxu0 0
      %234 = vmatpush2.bf16.msra.mxu0 0
      %235 = vmatprep.subr.bf16.mxu0 0
      %236 = vmatpush2.bf16.msra.mxu0 0
      %237 = vmatprep.subr.bf16.mxu0 0
      %238 = vmatpush2.bf16.msra.mxu0 0
      %239 = vmatprep.subr.bf16.mxu0 0
      %240 = vmatpush2.bf16.msra.mxu0 0
      %241 = vmatprep.subr.bf16.mxu0 0
      %242 = vmatpush2.bf16.msra.mxu0 0
      %243 = vmatprep.subr.bf16.mxu0 0
      %244 = vmatpush2.bf16.msra.mxu0 0
      %245 = vmatprep.mubr.bf16.mxu0 0
      %246 = vmatmul.mubr.bf16.gmra.mxu0 %v205
      %v247 = vpop.f32.mrf.mxu0
      %v248 = vadd.f32 0.0, %v247
      %v249 = vpop.f32.mrf.mxu0
      %v250 = vpop.f32.mrf.mxu0
      %v251 = vadd.f32 0.0, %v250
      %v252 = vpop.f32.mrf.mxu0
      %253 = vdwg.mxu0
      %v255 = vand.u32 %v186, %v209
      %257 = vmatprep.subr.bf16.mxu0 0
      %258 = vmatpush1.bf16.msra.mxu0 0
      %259 = vmatprep.subr.bf16.mxu0 0
      %260 = vmatpush1.bf16.msra.mxu0 0
      %261 = vmatprep.subr.bf16.mxu0 0
      %262 = vmatpush1.bf16.msra.mxu0 0
      %263 = vmatprep.subr.bf16.mxu0 0
      %264 = vmatpush1.bf16.msra.mxu0 0
      %265 = vmatprep.subr.bf16.mxu0 0
      %266 = vmatpush1.bf16.msra.mxu0 0
      %267 = vmatprep.subr.bf16.mxu0 0
      %268 = vmatpush1.bf16.msra.mxu0 0
      %269 = vmatprep.subr.bf16.mxu0 0
      %270 = vmatpush1.bf16.msra.mxu0 %v255
      %271 = vmatprep.subr.bf16.mxu0 0
      %272 = vmatpush1.bf16.msra.mxu0 %v185
      %273 = vmatprep.subr.bf16.mxu0 0
      %274 = vmatpush2.bf16.msra.mxu0 0
      %275 = vmatprep.subr.bf16.mxu0 0
      %276 = vmatpush2.bf16.msra.mxu0 0
      %277 = vmatprep.subr.bf16.mxu0 0
      %278 = vmatpush2.bf16.msra.mxu0 0
      %279 = vmatprep.subr.bf16.mxu0 0
      %280 = vmatpush2.bf16.msra.mxu0 0
      %281 = vmatprep.subr.bf16.mxu0 0
      %282 = vmatpush2.bf16.msra.mxu0 0
      %283 = vmatprep.subr.bf16.mxu0 0
      %284 = vmatpush2.bf16.msra.mxu0 0
      %285 = vmatprep.subr.bf16.mxu0 0
      %286 = vmatpush2.bf16.msra.mxu0 0
      %287 = vmatprep.subr.bf16.mxu0 0
      %288 = vmatpush2.bf16.msra.mxu0 0
      %289 = vmatprep.mubr.bf16.mxu0 0
      %290 = vmatmul.mubr.bf16.gmra.mxu0 %v205
      %v291 = vpop.f32.mrf.mxu0
      %v292 = vadd.f32 %v248, %v291
      %v293 = vpop.f32.mrf.mxu0
      %v294 = vpop.f32.mrf.mxu0
      %v295 = vadd.f32 %v251, %v294
      %v296 = vpop.f32.mrf.mxu0
      %297 = vdwg.mxu0
      %v299 = vand.u32 %v202, %v209
      %301 = vmatprep.subr.bf16.mxu0 0
      %302 = vmatpush1.bf16.msra.mxu0 0
      %303 = vmatprep.subr.bf16.mxu0 0
      %304 = vmatpush1.bf16.msra.mxu0 0
      %305 = vmatprep.subr.bf16.mxu0 0
      %306 = vmatpush1.bf16.msra.mxu0 0
      %307 = vmatprep.subr.bf16.mxu0 0
      %308 = vmatpush1.bf16.msra.mxu0 0
      %309 = vmatprep.subr.bf16.mxu0 0
      %310 = vmatpush1.bf16.msra.mxu0 0
      %311 = vmatprep.subr.bf16.mxu0 0
      %312 = vmatpush1.bf16.msra.mxu0 0
      %313 = vmatprep.subr.bf16.mxu0 0
      %314 = vmatpush1.bf16.msra.mxu0 %v299
      %315 = vmatprep.subr.bf16.mxu0 0
      %316 = vmatpush1.bf16.msra.mxu0 %v201
      %317 = vmatprep.subr.bf16.mxu0 0
      %318 = vmatpush2.bf16.msra.mxu0 0
      %319 = vmatprep.subr.bf16.mxu0 0
      %320 = vmatpush2.bf16.msra.mxu0 0
      %321 = vmatprep.subr.bf16.mxu0 0
      %322 = vmatpush2.bf16.msra.mxu0 0
      %323 = vmatprep.subr.bf16.mxu0 0
      %324 = vmatpush2.bf16.msra.mxu0 0
      %325 = vmatprep.subr.bf16.mxu0 0
      %326 = vmatpush2.bf16.msra.mxu0 0
      %327 = vmatprep.subr.bf16.mxu0 0
      %328 = vmatpush2.bf16.msra.mxu0 0
      %329 = vmatprep.subr.bf16.mxu0 0
      %330 = vmatpush2.bf16.msra.mxu0 0
      %331 = vmatprep.subr.bf16.mxu0 0
      %332 = vmatpush2.bf16.msra.mxu0 0
      %333 = vmatprep.mubr.bf16.mxu0 0
      %334 = vmatmul.mubr.bf16.gmra.mxu0 %v205
      %v335 = vpop.f32.mrf.mxu0
      %v336 = vadd.f32 0.0, %v335
      %v337 = vpop.f32.mrf.mxu0
      %v338 = vpop.f32.mrf.mxu0
      %v339 = vadd.f32 0.0, %v338
      %v340 = vpop.f32.mrf.mxu0
      %341 = vdwg.mxu0
      %v342 = vadd.f32 %v292, %v336
      %v343 = vadd.f32 %v295, %v339
      %vm344 = vcmask 261120
      %345 = vst.msk [vmem:[%s163] sm:$0xff] %vm344, %v342
      %vm346 = vcmask 253952
      %347 = vst.msk [vmem:[%s163 + $0x8] sm:$0x1] %vm346, %v343
      %p348 = scmp.lt.s32.totalorder %s13, 1
      %s349 = scalar_select %p348, %s13, 1
      %s350 = smul.addr %s349, 2
      %s351 = smul.addr %s350, 8
      %s352 = scalar_lea.vmem %s2, %s351
      // Predicated region
      $region29: #{tpu_custom_call.1} parent=27 // pred_check
        %p353 = pneg %p83
      $region30: #{tpu_custom_call.1} parent=27 // pred_check_branch
        %355 = sbr.rel (%p353) target = $region32
      $region31: #{tpu_custom_call.1} parent=27 // pred_region
        _
      $region32: #{tpu_custom_call.1} parent=27 // pred_fallthru
        _
    $region28: #{tpu_custom_call.1} parent=5 // pred_fallthru
      _
    %p356 = scmp.le.s32.totalorder 2, %s8
    // Predicated region
    $region33: #{tpu_custom_call.1} parent=5 // pred_check
      %p357 = pneg %p356
    $region34: #{tpu_custom_call.1} parent=5 // pred_check_branch
      %359 = sbr.rel (%p357) target = $region36
    $region35: #{tpu_custom_call.1} parent=5 // pred_region
      %s360 = ssub.s32 %s8, 2
      // Predicated region
      $region37: #{tpu_custom_call.1} parent=35 // pred_check
        %p361 = pneg %p89
      $region38: #{tpu_custom_call.1} parent=35 // pred_check_branch
        %363 = sbr.rel (%p361) target = $region40
      $region39: #{tpu_custom_call.1} parent=35 // pred_region
        %p364 = scmp.lt.s32.totalorder %s14, 1
        %s365 = scalar_select %p364, %s14, 1
        %s366 = smul.addr %s365, 2
        %s367 = smul.addr %s366, 8
        %s368 = scalar_lea.vmem %s2, %s367
      $region40: #{tpu_custom_call.1} parent=35 // pred_fallthru
        _
    $region36: #{tpu_custom_call.1} parent=5 // pred_fallthru
      _
  $region6: #{tpu_custom_call.1} parent=0 // loop_footer
    %s12 = sadd.s32 1, %s8
  $region7: #{tpu_custom_call.1} parent=0 // loop_footer_branch
    %7 = sbr.rel target = $region3
  $region8: #{tpu_custom_call.1} parent=0 // loop_exit
    _

</llo_original>
